<compile_context>
chip_gen: v6e
topology: v6e:2x2x1
jax: 0.10.0
libtpu: 0.0.40
codegen_flags: <defaults>
</compile_context>

<pallas_src>
import jax
import jax.numpy as jnp
from jax.experimental import pallas as pl
from jax.experimental.pallas import tpu as pltpu


def mlp_kernel(x_ref, w1_ref, b1_ref, w2_ref, b2_ref, o_ref):
    # fc1: (TB, D_in) @ (D_in, H) on the MXU with f32 accumulation.
    h = jnp.dot(x_ref[...], w1_ref[...], preferred_element_type=jnp.float32)
    h = jnp.maximum(h + b1_ref[...], 0.0)                   # bias + ReLU (VPU)
    # fc2 as VPU multiply + cross-lane (XLU) reduction; w2 is a (1, H) row.
    z = jnp.sum(h * w2_ref[...], axis=-1, keepdims=True)    # (TB, 1)
    o_ref[...] = jax.nn.sigmoid(z + b2_ref[0])              # sigmoid on EUP


def _round_up(n, m):
    return ((n + m - 1) // m) * m


@jax.jit
def simple_model_forward(x, w1, b1, w2, b2):
    """x: [B, D_in] f32 -> [B, 1] f32 = sigmoid(relu(x @ W1 + b1) @ W2 + b2).

    Weights are stored transposed relative to torch.nn.Linear:
    W1: [D_in, H], b1: [1, H], W2: [H, 1], b2: [1].
    """
    B, d_in = x.shape
    H = w1.shape[1]

    # Batch tile: multiple of 128 rows. Single tile for small batches; 1024
    # rows per tile for large ones so per-grid-step overhead (~0.35 us) is
    # amortized and x/out are double-buffered through VMEM.
    Bp = _round_up(max(B, 1), 128)
    if Bp <= 1024:
        TB = Bp
    else:
        TB = 1024
        Bp = _round_up(B, TB)
    num_tiles = Bp // TB

    xp = x if Bp == B else jnp.pad(x, ((0, Bp - B), (0, 0)))
    w2_row = w2.reshape(1, H)          # fc2 weight as a lane-resident row
    b2_s = b2.reshape(1)               # scalar bias for SMEM

    out = pl.pallas_call(
        mlp_kernel,
        out_shape=jax.ShapeDtypeStruct((Bp, 1), jnp.float32),
        grid=(num_tiles,),
        in_specs=[
            pl.BlockSpec((TB, d_in), lambda i: (i, 0)),    # x: streamed per tile
            pl.BlockSpec((d_in, H), lambda i: (0, 0)),     # W1: VMEM-resident
            pl.BlockSpec((1, H), lambda i: (0, 0)),        # b1: VMEM-resident
            pl.BlockSpec((1, H), lambda i: (0, 0)),        # W2 row: VMEM-resident
            pl.BlockSpec(memory_space=pltpu.MemorySpace.SMEM),  # b2 scalar in SMEM
        ],
        out_specs=pl.BlockSpec((TB, 1), lambda i: (i, 0)),
        compiler_params=pltpu.CompilerParams(
            dimension_semantics=("parallel",),  # shard batch tiles across v7x's 2 TCs
        ),
    )(xp, w1, b1, w2_row, b2_s)

    return out[:B] if Bp != B else out


def init_params(key, input_size, hidden_size):
    """Deterministic init mirroring nn.Linear's uniform(-1/sqrt(fan_in), ...)."""
    k1, k2, k3, k4 = jax.random.split(key, 4)
    bound1 = 1.0 / jnp.sqrt(jnp.float32(input_size))
    bound2 = 1.0 / jnp.sqrt(jnp.float32(hidden_size))
    # Stored pre-transposed: [D_in, H] and [H, 1].
    w1 = jax.random.uniform(k1, (input_size, hidden_size), jnp.float32,
                            minval=-bound1, maxval=bound1)
    b1 = jax.random.uniform(k2, (1, hidden_size), jnp.float32,
                            minval=-bound1, maxval=bound1)
    w2 = jax.random.uniform(k3, (hidden_size, 1), jnp.float32,
                            minval=-bound2, maxval=bound2)
    b2 = jax.random.uniform(k4, (1,), jnp.float32,
                            minval=-bound2, maxval=bound2)
    return w1, b1, w2, b2


if __name__ == "__main__":
    input_size = 32
    hidden_size = 64
    batch = 8

    key = jax.random.PRNGKey(0)
    kx, kp = jax.random.split(key)
    x = jax.random.normal(kx, (batch, input_size), jnp.float32)
    w1, b1, w2, b2 = init_params(kp, input_size, hidden_size)

    out = simple_model_forward(x, w1, b1, w2, b2)
    jax.block_until_ready(out)

    # Sanity check against plain-JAX reference.
    ref = jax.nn.sigmoid(
        jnp.maximum(x @ w1 + b1, 0.0) @ w2 + b2.reshape(1, 1)
    ).reshape(-1, 1)
    assert out.shape == (batch, 1)
    assert jnp.allclose(out, ref, atol=1e-5, rtol=1e-5)

    print("KERNEL_OK")
</pallas_src>

<mosaic_0001>
module attributes {stable_mosaic.version = 11 : i64} {
  func.func @mlp_kernel(%arg0: i32, %arg1: memref<128x32xf32, #tpu.memory_space<vmem>>, %arg2: memref<32x64xf32, #tpu.memory_space<vmem>>, %arg3: memref<1x64xf32, #tpu.memory_space<vmem>>, %arg4: memref<1x64xf32, #tpu.memory_space<vmem>>, %arg5: memref<1xf32, #tpu.memory_space<smem>>, %arg6: memref<128x1xf32, #tpu.memory_space<vmem>>) attributes {dimension_semantics = [#tpu.dimension_semantics<parallel>], iteration_bounds = array<i64: 1>, scalar_prefetch = 0 : i64, scratch_operands = 0 : i64, tpu.core_type = #tpu.core_type<tc>, window_params = [{transform_indices = @transform_0, window_bounds = array<i64: 128, 32>}, {pipeline_mode = #tpu.pipeline_mode<synchronous>, transform_indices = @transform_1, window_bounds = array<i64: 32, 64>}, {pipeline_mode = #tpu.pipeline_mode<synchronous>, transform_indices = @transform_2, window_bounds = array<i64: 1, 64>}, {pipeline_mode = #tpu.pipeline_mode<synchronous>, transform_indices = @transform_3, window_bounds = array<i64: 1, 64>}, {transform_indices = @transform_4, window_bounds = array<i64: 1>}, {transform_indices = @transform_5, window_bounds = array<i64: 128, 1>}]} {
    %c0 = arith.constant 0 : index
    %c0_0 = arith.constant 0 : index
    %0 = vector.load %arg1[%c0, %c0_0] : memref<128x32xf32, #tpu.memory_space<vmem>>, vector<128x32xf32>
    %c0_1 = arith.constant 0 : index
    %c0_2 = arith.constant 0 : index
    %1 = vector.load %arg2[%c0_1, %c0_2] : memref<32x64xf32, #tpu.memory_space<vmem>>, vector<32x64xf32>
    %cst = arith.constant dense<0.000000e+00> : vector<128x64xf32>
    %2 = tpu.matmul %0, %1, %cst {dimension_numbers = #tpu.dot_dimension_numbers<[1], [0], [0], [1], [0, 0, 1, 1], [], []>} : vector<128x32xf32>, vector<32x64xf32>, vector<128x64xf32> -> vector<128x64xf32>
    %c0_3 = arith.constant 0 : index
    %c0_4 = arith.constant 0 : index
    %3 = vector.load %arg3[%c0_3, %c0_4] : memref<1x64xf32, #tpu.memory_space<vmem>>, vector<1x64xf32>
    %4 = vector.broadcast %3 : vector<1x64xf32> to vector<128x64xf32>
    %5 = arith.addf %2, %4 : vector<128x64xf32>
    %cst_5 = arith.constant 0.000000e+00 : f32
    %6 = vector.broadcast %cst_5 : f32 to vector<128x64xf32>
    %7 = arith.maximumf %5, %6 : vector<128x64xf32>
    %c0_6 = arith.constant 0 : index
    %c0_7 = arith.constant 0 : index
    %8 = vector.load %arg4[%c0_6, %c0_7] : memref<1x64xf32, #tpu.memory_space<vmem>>, vector<1x64xf32>
    %9 = vector.broadcast %8 : vector<1x64xf32> to vector<128x64xf32>
    %10 = arith.mulf %7, %9 : vector<128x64xf32>
    %cst_8 = arith.constant dense<0.000000e+00> : vector<128xf32>
    %11 = vector.multi_reduction <add>, %10, %cst_8 [1] : vector<128x64xf32> to vector<128xf32>
    %12 = vector.shape_cast %11 : vector<128xf32> to vector<128x1xf32>
    %c0_9 = arith.constant 0 : index
    %13 = memref.load %arg5[%c0_9] : memref<1xf32, #tpu.memory_space<smem>>
    %14 = vector.broadcast %13 : f32 to vector<128x1xf32>
    %15 = arith.addf %12, %14 : vector<128x1xf32>
    %16 = arith.negf %15 : vector<128x1xf32>
    %17 = math.exp %16 : vector<128x1xf32>
    %cst_10 = arith.constant 1.000000e+00 : f32
    %18 = vector.broadcast %cst_10 : f32 to vector<128x1xf32>
    %19 = arith.addf %18, %17 : vector<128x1xf32>
    %20 = arith.divf %18, %19 : vector<128x1xf32>
    %c0_11 = arith.constant 0 : index
    %c0_12 = arith.constant 0 : index
    %21 = vector.load %arg6[%c0_11, %c0_12] : memref<128x1xf32, #tpu.memory_space<vmem>>, vector<128x1xf32>
    tpu.vector_store %arg6[%c0_11, %c0_12], %20 {strides = array<i32>} : memref<128x1xf32, #tpu.memory_space<vmem>>, vector<128x1xf32>,
    return
  }
  func.func @transform_0(%arg0: i32) -> (i32, i32) {
    %c0_i32 = arith.constant 0 : i32
    %c0_i32_0 = arith.constant 0 : i32
    return %arg0, %c0_i32 : i32, i32
  }
  func.func @transform_1(%arg0: i32) -> (i32, i32) {
    %c0_i32 = arith.constant 0 : i32
    %c0_i32_0 = arith.constant 0 : i32
    %c0_i32_1 = arith.constant 0 : i32
    return %c0_i32, %c0_i32_0 : i32, i32
  }
  func.func @transform_2(%arg0: i32) -> (i32, i32) {
    %c0_i32 = arith.constant 0 : i32
    %c0_i32_0 = arith.constant 0 : i32
    %c0_i32_1 = arith.constant 0 : i32
    return %c0_i32, %c0_i32_0 : i32, i32
  }
  func.func @transform_3(%arg0: i32) -> (i32, i32) {
    %c0_i32 = arith.constant 0 : i32
    %c0_i32_0 = arith.constant 0 : i32
    %c0_i32_1 = arith.constant 0 : i32
    return %c0_i32, %c0_i32_0 : i32, i32
  }
  func.func @transform_4(%arg0: i32) -> i32 {
    %c0_i32 = arith.constant 0 : i32
    %c0_i32_0 = arith.constant 0 : i32
    return %c0_i32 : i32
  }
  func.func @transform_5(%arg0: i32) -> (i32, i32) {
    %c0_i32 = arith.constant 0 : i32
    %c0_i32_0 = arith.constant 0 : i32
    return %arg0, %c0_i32 : i32, i32
  }
}

</mosaic_0001>

<llo_original>
// kernel: simple_model_forward.1
$region0: #{simple_model_forward.1}
  #allocation0 [shape = 'u32[]', space=smem, size = 0x4, offset = 0x4, fixed_abs, tag = 'smem constant byte address 0x4 - core index']
  #allocation1 [shape = 'u32[144,128]{1,0:T(1,128)}', space=vmem, size = 0x12000, scoped, tag = 'internal scratch']
  #allocation2 [shape = 'f32[1]{0:T(128)S(6)}', space=smem, size = 0x200, scoped, tag = 'scoped memory for simple_model_forward.1']
  %s0 = inlined_call_operand.vmem [shape: f32[128,32], index: 0, kind: input, shape index: {}]
  %s1 = inlined_call_operand.vmem [shape: f32[32,64], index: 1, kind: input, shape index: {}]
  %s2 = inlined_call_operand.vmem [shape: f32[1,64], index: 2, kind: input, shape index: {}]
  %s3 = inlined_call_operand.vmem [shape: f32[1,64], index: 3, kind: input, shape index: {}]
  %s4 = inlined_call_operand.<no memory space> [shape: f32[1], index: 4, kind: input, shape index: {}]
  %s5 = inlined_call_operand.vmem [shape: f32[128,1], index: 5, kind: output, shape index: {}]
  %s6 = sld [smem:[#allocation0]]
  $region30: #{simple_model_forward.1} parent=0
    _
  %s8 = ssub.s32 1, %s6
  %s9 = scalar_select 0, %s8, %s6
  %10 = sst [smem:[#allocation2]] %s4
  // Predicated region
  $region2: #{simple_model_forward.1} parent=0 // pred_check
    _
  $region3: #{simple_model_forward.1} parent=0 // pred_check_branch
    %12 = sbr.rel (0) target = $region5
  $region4: #{simple_model_forward.1} parent=0 // pred_region
    _
  $region5: #{simple_model_forward.1} parent=0 // pred_fallthru
    _
  // Predicated region
  $region6: #{simple_model_forward.1} parent=0 // pred_check
    _
  $region7: #{simple_model_forward.1} parent=0 // pred_check_branch
    %14 = sbr.rel (0) target = $region9
  $region8: #{simple_model_forward.1} parent=0 // pred_region
    _
  $region9: #{simple_model_forward.1} parent=0 // pred_fallthru
    _
  // Predicated region
  $region10: #{simple_model_forward.1} parent=0 // pred_check
    _
  $region11: #{simple_model_forward.1} parent=0 // pred_check_branch
    %16 = sbr.rel (0) target = $region13
  $region12: #{simple_model_forward.1} parent=0 // pred_region
    _
  $region13: #{simple_model_forward.1} parent=0 // pred_fallthru
    _
  // Predicated region
  $region14: #{simple_model_forward.1} parent=0 // pred_check
    _
  $region15: #{simple_model_forward.1} parent=0 // pred_check_branch
    %18 = sbr.rel (0) target = $region17
  $region16: #{simple_model_forward.1} parent=0 // pred_region
    _
  $region17: #{simple_model_forward.1} parent=0 // pred_fallthru
    _
  // Predicated region
  $region18: #{simple_model_forward.1} parent=0 // pred_check
    _
  $region19: #{simple_model_forward.1} parent=0 // pred_check_branch
    %20 = sbr.rel (0) target = $region21
  $region20: #{simple_model_forward.1} parent=0 // pred_region
    _
  $region21: #{simple_model_forward.1} parent=0 // pred_fallthru
    _
  %v21 = vld [vmem:[%s0] sm:$0xff]
  %v22 = vld [vmem:[%s0 + $0x8] sm:$0xff]
  %v23 = vld [vmem:[%s0 + $0x10] sm:$0xff]
  %v24 = vld [vmem:[%s0 + $0x18] sm:$0xff]
  %v25 = vld [vmem:[%s0 + $0x20] sm:$0xff]
  %v26 = vld [vmem:[%s0 + $0x28] sm:$0xff]
  %v27 = vld [vmem:[%s0 + $0x30] sm:$0xff]
  %v28 = vld [vmem:[%s0 + $0x38] sm:$0xff]
  %v29 = vld [vmem:[%s0 + $0x40] sm:$0xff]
  %v30 = vld [vmem:[%s0 + $0x48] sm:$0xff]
  %v31 = vld [vmem:[%s0 + $0x50] sm:$0xff]
  %v32 = vld [vmem:[%s0 + $0x58] sm:$0xff]
  %v33 = vld [vmem:[%s0 + $0x60] sm:$0xff]
  %v34 = vld [vmem:[%s0 + $0x68] sm:$0xff]
  %v35 = vld [vmem:[%s0 + $0x70] sm:$0xff]
  %v36 = vld [vmem:[%s0 + $0x78] sm:$0xff]
  %v37 = vld [vmem:[%s1] sm:$0xff]
  %v38 = vld [vmem:[%s1 + $0x8] sm:$0xff]
  %v39 = vld [vmem:[%s1 + $0x10] sm:$0xff]
  %v40 = vld [vmem:[%s1 + $0x18] sm:$0xff]
  %v41 = vld [vmem:[%s2] sm:$0x1]
  %v43 = vlaneseq
  %v44 = vshrl.u32 %v43, 7
  %v45 = vsub.s32 0, %v44
  %v46 = vrot.slane %v41, %v45
  %vm48 = vcmask 261120
  %v50 = vsel %vm48, %v21, 0
  %v53 = vsel %vm48, %v22, 0
  %v56 = vsel %vm48, %v23, 0
  %v59 = vsel %vm48, %v24, 0
  %v62 = vsel %vm48, %v25, 0
  %v65 = vsel %vm48, %v26, 0
  %v68 = vsel %vm48, %v27, 0
  %v71 = vsel %vm48, %v28, 0
  %v74 = vsel %vm48, %v29, 0
  %v77 = vsel %vm48, %v30, 0
  %v80 = vsel %vm48, %v31, 0
  %v83 = vsel %vm48, %v32, 0
  %v86 = vsel %vm48, %v33, 0
  %v89 = vsel %vm48, %v34, 0
  %v92 = vsel %vm48, %v35, 0
  %v95 = vsel %vm48, %v36, 0
  %97 = vmatprep.subr.mxu0 0.0
  %98 = vmatpush1.msra.mxu0 0.0
  %99 = vmatprep.subr.mxu0 0.0
  %100 = vmatpush1.msra.mxu0 0.0
  %101 = vmatprep.subr.mxu0 0.0
  %102 = vmatpush1.msra.mxu0 0.0
  %103 = vmatprep.subr.mxu0 0.0
  %104 = vmatpush1.msra.mxu0 0.0
  %105 = vmatprep.subr.mxu0 0.0
  %106 = vmatpush1.msra.mxu0 0.0
  %107 = vmatprep.subr.mxu0 0.0
  %108 = vmatpush1.msra.mxu0 0.0
  %109 = vmatprep.subr.mxu0 0.0
  %110 = vmatpush1.msra.mxu0 0.0
  %111 = vmatprep.subr.mxu0 0.0
  %112 = vmatpush1.msra.mxu0 0.0
  %113 = vmatprep.subr.mxu0 0.0
  %114 = vmatpush1.msra.mxu0 0.0
  %115 = vmatprep.subr.mxu0 0.0
  %116 = vmatpush1.msra.mxu0 0.0
  %117 = vmatprep.subr.mxu0 0.0
  %118 = vmatpush1.msra.mxu0 0.0
  %119 = vmatprep.subr.mxu0 0.0
  %120 = vmatpush1.msra.mxu0 0.0
  %121 = vmatprep.subr.mxu0 0.0
  %122 = vmatpush1.msra.mxu0 %v40
  %123 = vmatprep.subr.mxu0 0.0
  %124 = vmatpush1.msra.mxu0 %v39
  %125 = vmatprep.subr.mxu0 0.0
  %126 = vmatpush1.msra.mxu0 %v38
  %127 = vmatprep.subr.mxu0 0.0
  %128 = vmatpush1.msra.mxu0 %v37
  %129 = vmatprep.subr.mxu0 0.0
  %130 = vmatpush2.msra.mxu0 0.0
  %131 = vmatprep.subr.mxu0 0.0
  %132 = vmatpush2.msra.mxu0 0.0
  %133 = vmatprep.subr.mxu0 0.0
  %134 = vmatpush2.msra.mxu0 0.0
  %135 = vmatprep.subr.mxu0 0.0
  %136 = vmatpush2.msra.mxu0 0.0
  %137 = vmatprep.subr.mxu0 0.0
  %138 = vmatpush2.msra.mxu0 0.0
  %139 = vmatprep.subr.mxu0 0.0
  %140 = vmatpush2.msra.mxu0 0.0
  %141 = vmatprep.subr.mxu0 0.0
  %142 = vmatpush2.msra.mxu0 0.0
  %143 = vmatprep.subr.mxu0 0.0
  %144 = vmatpush2.msra.mxu0 0.0
  %145 = vmatprep.subr.mxu0 0.0
  %146 = vmatpush2.msra.mxu0 0.0
  %147 = vmatprep.subr.mxu0 0.0
  %148 = vmatpush2.msra.mxu0 0.0
  %149 = vmatprep.subr.mxu0 0.0
  %150 = vmatpush2.msra.mxu0 0.0
  %151 = vmatprep.subr.mxu0 0.0
  %152 = vmatpush2.msra.mxu0 0.0
  %153 = vmatprep.subr.mxu0 0.0
  %154 = vmatpush2.msra.mxu0 0.0
  %155 = vmatprep.subr.mxu0 0.0
  %156 = vmatpush2.msra.mxu0 0.0
  %157 = vmatprep.subr.mxu0 0.0
  %158 = vmatpush2.msra.mxu0 0.0
  %159 = vmatprep.subr.mxu0 0.0
  %160 = vmatpush2.msra.mxu0 0.0
  %161 = vmatprep.mubr.f32.mxu0 0.0
  %162 = vmatmul.mubr.f32.gmra.mxu0 %v50
  %v163 = vpop.f32.mrf.mxu0
  %v164 = vadd.f32 %v46, %v163
  %v165 = vpop.f32.mrf.mxu0
  %166 = vmatprep.mubr.f32.mxu0 0.0
  %167 = vmatmul.mubr.f32.gmra.mxu0 %v53
  %v168 = vpop.f32.mrf.mxu0
  %v169 = vadd.f32 %v46, %v168
  %v170 = vpop.f32.mrf.mxu0
  %171 = vmatprep.mubr.f32.mxu0 0.0
  %172 = vmatmul.mubr.f32.gmra.mxu0 %v56
  %v173 = vpop.f32.mrf.mxu0
  %v174 = vadd.f32 %v46, %v173
  %v175 = vpop.f32.mrf.mxu0
  %176 = vmatprep.mubr.f32.mxu0 0.0
  %177 = vmatmul.mubr.f32.gmra.mxu0 %v59
  %v178 = vpop.f32.mrf.mxu0
  %v179 = vadd.f32 %v46, %v178
  %v180 = vpop.f32.mrf.mxu0
  %181 = vmatprep.mubr.f32.mxu0 0.0
  %182 = vmatmul.mubr.f32.gmra.mxu0 %v62
  %v183 = vpop.f32.mrf.mxu0
  %v184 = vadd.f32 %v46, %v183
  %v185 = vpop.f32.mrf.mxu0
  %186 = vmatprep.mubr.f32.mxu0 0.0
  %187 = vmatmul.mubr.f32.gmra.mxu0 %v65
  %v188 = vpop.f32.mrf.mxu0
  %v189 = vadd.f32 %v46, %v188
  %v190 = vpop.f32.mrf.mxu0
  %191 = vmatprep.mubr.f32.mxu0 0.0
  %192 = vmatmul.mubr.f32.gmra.mxu0 %v68
  %v193 = vpop.f32.mrf.mxu0
  %v194 = vadd.f32 %v46, %v193
  %v195 = vpop.f32.mrf.mxu0
  %196 = vmatprep.mubr.f32.mxu0 0.0
  %197 = vmatmul.mubr.f32.gmra.mxu0 %v71
  %v198 = vpop.f32.mrf.mxu0
  %v199 = vadd.f32 %v46, %v198
  %v200 = vpop.f32.mrf.mxu0
  %201 = vmatprep.mubr.f32.mxu0 0.0
  %202 = vmatmul.mubr.f32.gmra.mxu0 %v74
  %v203 = vpop.f32.mrf.mxu0
  %v204 = vadd.f32 %v46, %v203
  %v205 = vpop.f32.mrf.mxu0
  %206 = vmatprep.mubr.f32.mxu0 0.0
  %207 = vmatmul.mubr.f32.gmra.mxu0 %v77
  %v208 = vpop.f32.mrf.mxu0
  %v209 = vadd.f32 %v46, %v208
  %v210 = vpop.f32.mrf.mxu0
  %211 = vmatprep.mubr.f32.mxu0 0.0
  %212 = vmatmul.mubr.f32.gmra.mxu0 %v80
  %v213 = vpop.f32.mrf.mxu0
  %v214 = vadd.f32 %v46, %v213
  %v215 = vpop.f32.mrf.mxu0
  %216 = vmatprep.mubr.f32.mxu0 0.0
  %217 = vmatmul.mubr.f32.gmra.mxu0 %v83
  %v218 = vpop.f32.mrf.mxu0
  %v219 = vadd.f32 %v46, %v218
  %v220 = vpop.f32.mrf.mxu0
  %221 = vmatprep.mubr.f32.mxu0 0.0
  %222 = vmatmul.mubr.f32.gmra.mxu0 %v86
  %v223 = vpop.f32.mrf.mxu0
  %v224 = vadd.f32 %v46, %v223
  %v225 = vpop.f32.mrf.mxu0
  %226 = vmatprep.mubr.f32.mxu0 0.0
  %227 = vmatmul.mubr.f32.gmra.mxu0 %v89
  %v228 = vpop.f32.mrf.mxu0
  %v229 = vadd.f32 %v46, %v228
  %v230 = vpop.f32.mrf.mxu0
  %231 = vmatprep.mubr.f32.mxu0 0.0
  %232 = vmatmul.mubr.f32.gmra.mxu0 %v92
  %v233 = vpop.f32.mrf.mxu0
  %v234 = vadd.f32 %v46, %v233
  %v235 = vpop.f32.mrf.mxu0
  %236 = vmatprep.mubr.f32.mxu0 0.0
  %237 = vmatmul.mubr.f32.gmra.mxu0 %v95
  %v238 = vpop.f32.mrf.mxu0
  %v239 = vadd.f32 %v46, %v238
  %v240 = vpop.f32.mrf.mxu0
  %241 = vdwg.mxu0
  %v242 = vmax.f32 %v164, 0.0
  %v243 = vmax.f32 %v169, 0.0
  %v244 = vmax.f32 %v174, 0.0
  %v245 = vmax.f32 %v179, 0.0
  %v246 = vmax.f32 %v184, 0.0
  %v247 = vmax.f32 %v189, 0.0
  %v248 = vmax.f32 %v194, 0.0
  %v249 = vmax.f32 %v199, 0.0
  %v250 = vmax.f32 %v204, 0.0
  %v251 = vmax.f32 %v209, 0.0
  %v252 = vmax.f32 %v214, 0.0
  %v253 = vmax.f32 %v219, 0.0
  %v254 = vmax.f32 %v224, 0.0
  %v255 = vmax.f32 %v229, 0.0
  %v256 = vmax.f32 %v234, 0.0
  %v257 = vmax.f32 %v239, 0.0
  %v258 = vld [vmem:[%s3] sm:$0x1]
  %v260 = vlaneseq
  %v261 = vshrl.u32 %v260, 7
  %v262 = vsub.s32 0, %v261
  %v263 = vrot.slane %v258, %v262
  %v265 = vmul.f32 %v242, %v263
  %v266 = vmul.f32 %v243, %v263
  %v267 = vmul.f32 %v244, %v263
  %v268 = vmul.f32 %v245, %v263
  %v269 = vmul.f32 %v246, %v263
  %v270 = vmul.f32 %v247, %v263
  %v271 = vmul.f32 %v248, %v263
  %v272 = vmul.f32 %v249, %v263
  %v273 = vmul.f32 %v250, %v263
  %v274 = vmul.f32 %v251, %v263
  %v275 = vmul.f32 %v252, %v263
  %v276 = vmul.f32 %v253, %v263
  %v277 = vmul.f32 %v254, %v263
  %v278 = vmul.f32 %v255, %v263
  %v279 = vmul.f32 %v256, %v263
  %v280 = vmul.f32 %v257, %v263
  %vm281 = vcmask 523264
  %v282 = vsel %vm281, %v265, 0.0
  %283 = vadd.xlane.f32.xlu0 %v282
  %v284 = vpop.xlane.xlu0 %283
  %v285 = vsel %vm281, %v266, 0.0
  %286 = vadd.xlane.f32.xlu0 %v285
  %v287 = vpop.xlane.xlu0 %286
  %v288 = vsel %vm281, %v267, 0.0
  %289 = vadd.xlane.f32.xlu0 %v288
  %v290 = vpop.xlane.xlu0 %289
  %v291 = vsel %vm281, %v268, 0.0
  %292 = vadd.xlane.f32.xlu0 %v291
  %v293 = vpop.xlane.xlu0 %292
  %v294 = vsel %vm281, %v269, 0.0
  %295 = vadd.xlane.f32.xlu0 %v294
  %v296 = vpop.xlane.xlu0 %295
  %v297 = vsel %vm281, %v270, 0.0
  %298 = vadd.xlane.f32.xlu0 %v297
  %v299 = vpop.xlane.xlu0 %298
  %v300 = vsel %vm281, %v271, 0.0
  %301 = vadd.xlane.f32.xlu0 %v300
  %v302 = vpop.xlane.xlu0 %301
  %v303 = vsel %vm281, %v272, 0.0
  %304 = vadd.xlane.f32.xlu0 %v303
  %v305 = vpop.xlane.xlu0 %304
  %v306 = vsel %vm281, %v273, 0.0
  %307 = vadd.xlane.f32.xlu0 %v306
  %v308 = vpop.xlane.xlu0 %307
  %v309 = vsel %vm281, %v274, 0.0
  %310 = vadd.xlane.f32.xlu0 %v309
  %v311 = vpop.xlane.xlu0 %310
  %v312 = vsel %vm281, %v275, 0.0
  %313 = vadd.xlane.f32.xlu0 %v312
  %v314 = vpop.xlane.xlu0 %313
  %v315 = vsel %vm281, %v276, 0.0
  %316 = vadd.xlane.f32.xlu0 %v315
  %v317 = vpop.xlane.xlu0 %316
  %v318 = vsel %vm281, %v277, 0.0
  %319 = vadd.xlane.f32.xlu0 %v318
  %v320 = vpop.xlane.xlu0 %319
  %v321 = vsel %vm281, %v278, 0.0
  %322 = vadd.xlane.f32.xlu0 %v321
  %v323 = vpop.xlane.xlu0 %322
  %v324 = vsel %vm281, %v279, 0.0
  %325 = vadd.xlane.f32.xlu0 %v324
  %v326 = vpop.xlane.xlu0 %325
  %v327 = vsel %vm281, %v280, 0.0
  %328 = vadd.xlane.f32.xlu0 %v327
  %v329 = vpop.xlane.xlu0 %328
  %s330 = sld [smem:[#allocation2]]
  %v331 = vstv %s330
  %v332 = vadd.f32 %v284, %v331
  %v333 = vadd.f32 %v287, %v331
  %v334 = vadd.f32 %v290, %v331
  %v335 = vadd.f32 %v293, %v331
  %v336 = vadd.f32 %v296, %v331
  %v337 = vadd.f32 %v299, %v331
  %v338 = vadd.f32 %v302, %v331
  %v339 = vadd.f32 %v305, %v331
  %v340 = vadd.f32 %v308, %v331
  %v341 = vadd.f32 %v311, %v331
  %v342 = vadd.f32 %v314, %v331
  %v343 = vadd.f32 %v317, %v331
  %v344 = vadd.f32 %v320, %v331
  %v345 = vadd.f32 %v323, %v331
  %v346 = vadd.f32 %v326, %v331
  %v347 = vadd.f32 %v329, %v331
  %v348 = vxor.u32 %v332, 2147483648
  %v349 = vxor.u32 %v333, 2147483648
  %v350 = vxor.u32 %v334, 2147483648
  %v351 = vxor.u32 %v335, 2147483648
  %v352 = vxor.u32 %v336, 2147483648
  %v353 = vxor.u32 %v337, 2147483648
  %v354 = vxor.u32 %v338, 2147483648
  %v355 = vxor.u32 %v339, 2147483648
  %v356 = vxor.u32 %v340, 2147483648
  %v357 = vxor.u32 %v341, 2147483648
  %v358 = vxor.u32 %v342, 2147483648
  %v359 = vxor.u32 %v343, 2147483648
  %v360 = vxor.u32 %v344, 2147483648
  %v361 = vxor.u32 %v345, 2147483648
  %v362 = vxor.u32 %v346, 2147483648
  %v363 = vxor.u32 %v347, 2147483648
  %v364 = vmul.f32 %v348, 1.442695
  %v365 = vpow.pop %v364
  %v366 = vmul.f32 %v349, 1.442695
  %v367 = vpow.pop %v366
  %v368 = vmul.f32 %v350, 1.442695
  %v369 = vpow.pop %v368
  %v370 = vmul.f32 %v351, 1.442695
  %v371 = vpow.pop %v370
  %v372 = vmul.f32 %v352, 1.442695
  %v373 = vpow.pop %v372
  %v374 = vmul.f32 %v353, 1.442695
  %v375 = vpow.pop %v374
  %v376 = vmul.f32 %v354, 1.442695
  %v377 = vpow.pop %v376
  %v378 = vmul.f32 %v355, 1.442695
  %v379 = vpow.pop %v378
  %v380 = vmul.f32 %v356, 1.442695
  %v381 = vpow.pop %v380
  %v382 = vmul.f32 %v357, 1.442695
  %v383 = vpow.pop %v382
  %v384 = vmul.f32 %v358, 1.442695
  %v385 = vpow.pop %v384
  %v386 = vmul.f32 %v359, 1.442695
  %v387 = vpow.pop %v386
  %v388 = vmul.f32 %v360, 1.442695
  %v389 = vpow.pop %v388
  %v390 = vmul.f32 %v361, 1.442695
  %v391 = vpow.pop %v390
  %v392 = vmul.f32 %v362, 1.442695
  %v393 = vpow.pop %v392
  %v394 = vmul.f32 %v363, 1.442695
  %v395 = vpow.pop %v394
  %v396 = vadd.f32 %v365, 1.0
  %v397 = vadd.f32 %v367, 1.0
  %v398 = vadd.f32 %v369, 1.0
  %v399 = vadd.f32 %v371, 1.0
  %v400 = vadd.f32 %v373, 1.0
  %v401 = vadd.f32 %v375, 1.0
  %v402 = vadd.f32 %v377, 1.0
  %v403 = vadd.f32 %v379, 1.0
  %v404 = vadd.f32 %v381, 1.0
  %v405 = vadd.f32 %v383, 1.0
  %v406 = vadd.f32 %v385, 1.0
  %v407 = vadd.f32 %v387, 1.0
  %v408 = vadd.f32 %v389, 1.0
  %v409 = vadd.f32 %v391, 1.0
  %v410 = vadd.f32 %v393, 1.0
  %v411 = vadd.f32 %v395, 1.0
  %v412 = vrcp.pop %v396
  %v413 = vmul.f32 1.0, %v412
  %v414 = vrcp.pop %v397
  %v415 = vmul.f32 1.0, %v414
  %v416 = vrcp.pop %v398
  %v417 = vmul.f32 1.0, %v416
  %v418 = vrcp.pop %v399
  %v419 = vmul.f32 1.0, %v418
  %v420 = vrcp.pop %v400
  %v421 = vmul.f32 1.0, %v420
  %v422 = vrcp.pop %v401
  %v423 = vmul.f32 1.0, %v422
  %v424 = vrcp.pop %v402
  %v425 = vmul.f32 1.0, %v424
  %v426 = vrcp.pop %v403
  %v427 = vmul.f32 1.0, %v426
  %v428 = vrcp.pop %v404
  %v429 = vmul.f32 1.0, %v428
  %v430 = vrcp.pop %v405
  %v431 = vmul.f32 1.0, %v430
  %v432 = vrcp.pop %v406
  %v433 = vmul.f32 1.0, %v432
  %v434 = vrcp.pop %v407
  %v435 = vmul.f32 1.0, %v434
  %v436 = vrcp.pop %v408
  %v437 = vmul.f32 1.0, %v436
  %v438 = vrcp.pop %v409
  %v439 = vmul.f32 1.0, %v438
  %v440 = vrcp.pop %v410
  %v441 = vmul.f32 1.0, %v440
  %v442 = vrcp.pop %v411
  %v443 = vmul.f32 1.0, %v442
  %vm444 = vcmask 7168
  %445 = vst.msk [vmem:[%s5] sm:$0xff] %vm444, %v413
  %446 = vst.msk [vmem:[%s5 + $0x8] sm:$0xff] %vm444, %v415
  %447 = vst.msk [vmem:[%s5 + $0x10] sm:$0xff] %vm444, %v417
  %448 = vst.msk [vmem:[%s5 + $0x18] sm:$0xff] %vm444, %v419
  %449 = vst.msk [vmem:[%s5 + $0x20] sm:$0xff] %vm444, %v421
  %450 = vst.msk [vmem:[%s5 + $0x28] sm:$0xff] %vm444, %v423
  %451 = vst.msk [vmem:[%s5 + $0x30] sm:$0xff] %vm444, %v425
  %452 = vst.msk [vmem:[%s5 + $0x38] sm:$0xff] %vm444, %v427
  %453 = vst.msk [vmem:[%s5 + $0x40] sm:$0xff] %vm444, %v429
  %454 = vst.msk [vmem:[%s5 + $0x48] sm:$0xff] %vm444, %v431
  %455 = vst.msk [vmem:[%s5 + $0x50] sm:$0xff] %vm444, %v433
  %456 = vst.msk [vmem:[%s5 + $0x58] sm:$0xff] %vm444, %v435
  %457 = vst.msk [vmem:[%s5 + $0x60] sm:$0xff] %vm444, %v437
  %458 = vst.msk [vmem:[%s5 + $0x68] sm:$0xff] %vm444, %v439
  %459 = vst.msk [vmem:[%s5 + $0x70] sm:$0xff] %vm444, %v441
  %460 = vst.msk [vmem:[%s5 + $0x78] sm:$0xff] %vm444, %v443
  // Predicated region
  $region22: #{simple_model_forward.1} parent=0 // pred_check
    _
  $region23: #{simple_model_forward.1} parent=0 // pred_check_branch
    %462 = sbr.rel (0) target = $region25
  $region24: #{simple_model_forward.1} parent=0 // pred_region
    _
  $region25: #{simple_model_forward.1} parent=0 // pred_fallthru
    _
  // Predicated region
  $region26: #{simple_model_forward.1} parent=0 // pred_check
    _
  $region27: #{simple_model_forward.1} parent=0 // pred_check_branch
    %464 = sbr.rel (0) target = $region29
  $region28: #{simple_model_forward.1} parent=0 // pred_region
    _
  $region29: #{simple_model_forward.1} parent=0 // pred_fallthru
    _

</llo_original>
